<compile_context>
chip_gen: v6e
topology: v6e:2x2x1
jax: 0.10.0
libtpu: 0.0.40
codegen_flags: <defaults>
</compile_context>

<pallas_src>
import functools

import jax
import jax.numpy as jnp
from jax.experimental import pallas as pl
from jax.experimental.pallas import tpu as pltpu

EPS = 1e-5  # torch.nn.LayerNorm default


def _image_proj_kernel(x_ref, w_ref, b_ref, g_ref, beta_ref, o_ref,
                       *, d_out, tokens_per_step):
    # x_ref:    (B, D_in)              resident image embeddings (same block each step)
    # w_ref:    (1, D_in, k*D_out)     contiguous weight slab for this step's k tokens
    # b_ref:    (1, k*D_out)           matching bias columns (f32)
    # g_ref:    (1, D_out)             LayerNorm weight (f32, resident)
    # beta_ref: (1, D_out)             LayerNorm bias   (f32, resident)
    # o_ref:    (B, k*D_out)           lane-dense output slab for this step
    x = x_ref[...]
    w = w_ref[0]                       # (D_in, k*D_out)
    if x.dtype != w.dtype:             # static dtype dispatch (bf16-weight path)
        x = x.astype(w.dtype)
    # Linear: x @ W_s on the MXU with f32 accumulation; bias added in f32.
    h = jnp.dot(x, w, preferred_element_type=jnp.float32)
    h = h + b_ref[...].astype(jnp.float32)
    g = g_ref[...]
    beta = beta_ref[...]
    # Per-token LayerNorm over the last d_out lanes, via static lane-aligned
    # slices (d_out is a multiple of 128 -> no relayout, no masked stores).
    for i in range(tokens_per_step):
        lo = i * d_out
        hi = h[:, lo:lo + d_out]
        mean = jnp.mean(hi, axis=-1, keepdims=True)
        centered = hi - mean
        var = jnp.mean(jnp.square(centered), axis=-1, keepdims=True)
        normed = centered * jax.lax.rsqrt(var + EPS)
        o_ref[:, lo:lo + d_out] = (normed * g + beta).astype(o_ref.dtype)


def _choose_tokens_per_step(T, d_in, d_out, weight_dtype):
    """Tokens fused per grid step.

    * Cap the double-buffered weight block well under the 32 MiB scoped VMEM
      default (v7x physical VMEM is only 64 MiB): block <= ~12 MiB.
    * Keep >= 2 grid steps when T is even so v7x's two TensorCores each stream
      half the weight (dimension_semantics=("parallel",)).
    """
    bytes_per_token = d_in * d_out * jnp.dtype(weight_dtype).itemsize
    budget = 12 << 20
    k = max(1, min(T, budget // bytes_per_token))
    if T % 2 == 0:
        k = min(k, max(1, T // 2))
    while T % k:
        k -= 1
    return int(k)


def prepare_image_proj_params(proj_w, proj_b, ln_w, ln_b, *,
                              clip_extra_context_tokens, cross_attention_dim,
                              weight_dtype=None, tokens_per_step=None):
    """One-time (parameter-load-time) prep.

    proj_w: (d_in, T*d_out) in x @ W layout; optionally cast to `weight_dtype`
            (e.g. bf16) and re-laid-out contiguously per grid step as
            (n_steps, d_in, k*d_out) so each step's weight DMA is full-burst.
    """
    T = clip_extra_context_tokens
    d_out = cross_attention_dim
    d_in = proj_w.shape[0]
    assert proj_w.shape == (d_in, T * d_out), proj_w.shape

    w = proj_w if weight_dtype is None else proj_w.astype(weight_dtype)
    if tokens_per_step is None:
        tokens_per_step = _choose_tokens_per_step(T, d_in, d_out, w.dtype)
    assert T % tokens_per_step == 0
    n_steps = T // tokens_per_step

    # Contiguous per-step slabs: column block s of (d_in, T*d_out) -> slab s.
    w_steps = w.reshape(d_in, n_steps, tokens_per_step * d_out).transpose(1, 0, 2)

    return dict(
        w_steps=w_steps,                                        # (n_steps, d_in, k*d_out)
        b2d=proj_b.reshape(1, T * d_out).astype(jnp.float32),   # (1, T*d_out)
        gamma=ln_w.reshape(1, d_out).astype(jnp.float32),       # (1, d_out)
        beta=ln_b.reshape(1, d_out).astype(jnp.float32),        # (1, d_out)
        tokens_per_step=tokens_per_step,
    )


def image_proj_model(image_embeds, params, *,
                     clip_extra_context_tokens, cross_attention_dim):
    """Pallas ImageProjModel.forward.

    image_embeds: (B, clip_embeddings_dim)
    params:       output of prepare_image_proj_params
    returns:      (B, T, cross_attention_dim) in image_embeds.dtype
    """
    T = clip_extra_context_tokens
    d_out = cross_attention_dim
    k = params["tokens_per_step"]
    w_steps = params["w_steps"]
    n_steps, d_in, kd = w_steps.shape
    assert kd == k * d_out and n_steps * k == T

    B_orig, d_in_x = image_embeds.shape
    assert d_in_x == d_in

    # Pad batch to a sublane multiple (8) so all stores are unmasked.
    pad = (-B_orig) % 8
    x = jnp.pad(image_embeds, ((0, pad), (0, 0))) if pad else image_embeds
    B = B_orig + pad

    kernel = functools.partial(_image_proj_kernel, d_out=d_out, tokens_per_step=k)

    out_flat = pl.pallas_call(
        kernel,
        out_shape=jax.ShapeDtypeStruct((B, T * d_out), image_embeds.dtype),
        grid_spec=pltpu.PrefetchScalarGridSpec(
            num_scalar_prefetch=0,
            grid=(n_steps,),
            in_specs=[
                # x: identical block every step -> resident in VMEM.
                pl.BlockSpec((B, d_in), lambda s: (0, 0)),
                # W_s: contiguous (d_in, k*d_out) slab for step s (default
                # double buffering; Buffered(3) dropped per review).
                pl.BlockSpec((1, d_in, k * d_out), lambda s: (s, 0, 0)),
                # b_s: matching bias columns.
                pl.BlockSpec((1, k * d_out), lambda s: (0, s)),
                # LayerNorm gamma / beta: resident.
                pl.BlockSpec((1, d_out), lambda s: (0, 0)),
                pl.BlockSpec((1, d_out), lambda s: (0, 0)),
            ],
            # Lane-dense (B, k*d_out) output slab per step; no transpose.
            out_specs=pl.BlockSpec((B, k * d_out), lambda s: (0, s)),
        ),
        compiler_params=pltpu.CompilerParams(
            # Steps are independent; on v7x they shard across both TensorCores.
            dimension_semantics=("parallel",),
        ),
    )(x, w_steps, params["b2d"], params["gamma"], params["beta"])

    # Row-major (B, T*d_out) -> (B, T, d_out): pure reshape, matches torch.
    out = out_flat.reshape(B, T, d_out)
    return out[:B_orig] if pad else out


def reference(image_embeds, proj_w, proj_b, ln_w, ln_b, T, d_out):
    """Pure-JAX reference of the PyTorch forward, for correctness check."""
    h = image_embeds @ proj_w + proj_b                       # (B, T*d_out)
    h = h.reshape(-1, T, d_out)
    mean = jnp.mean(h, axis=-1, keepdims=True)
    var = jnp.mean(jnp.square(h - mean), axis=-1, keepdims=True)
    normed = (h - mean) / jnp.sqrt(var + EPS)
    return normed * ln_w + ln_b


if __name__ == "__main__":
    # Small-but-aligned shapes consistent with the module's __init__:
    #   cross_attention_dim=128, clip_embeddings_dim=128, clip_extra_context_tokens=4
    B = 8
    clip_embeddings_dim = 128
    cross_attention_dim = 128
    clip_extra_context_tokens = 4

    key = jax.random.PRNGKey(0)
    k_x, k_w, k_b, k_g, k_beta = jax.random.split(key, 5)

    image_embeds = jax.random.normal(k_x, (B, clip_embeddings_dim), dtype=jnp.float32)

    # Deterministic synthetic parameters (Linear + LayerNorm shapes from __init__).
    proj_w = (jax.random.normal(
        k_w, (clip_embeddings_dim, clip_extra_context_tokens * cross_attention_dim),
        dtype=jnp.float32) * 0.02)
    proj_b = (jax.random.normal(
        k_b, (clip_extra_context_tokens * cross_attention_dim,),
        dtype=jnp.float32) * 0.01)
    ln_w = jnp.ones((cross_attention_dim,), dtype=jnp.float32) \
        + 0.01 * jax.random.normal(k_g, (cross_attention_dim,), dtype=jnp.float32)
    ln_b = 0.01 * jax.random.normal(k_beta, (cross_attention_dim,), dtype=jnp.float32)

    # --- f32 weights: exact check against the pure-JAX reference -------------
    params_f32 = prepare_image_proj_params(
        proj_w, proj_b, ln_w, ln_b,
        clip_extra_context_tokens=clip_extra_context_tokens,
        cross_attention_dim=cross_attention_dim,
    )
    out = image_proj_model(
        image_embeds, params_f32,
        clip_extra_context_tokens=clip_extra_context_tokens,
        cross_attention_dim=cross_attention_dim,
    )
    out = jax.block_until_ready(out)

    ref = reference(image_embeds, proj_w, proj_b, ln_w, ln_b,
                    clip_extra_context_tokens, cross_attention_dim)
    assert out.shape == (B, clip_extra_context_tokens, cross_attention_dim), out.shape
    assert jnp.allclose(out, ref, atol=1e-4, rtol=1e-4), \
        float(jnp.max(jnp.abs(out - ref)))

    # --- bf16 weights (bandwidth-optimized path) ------------------------------
    # Reference is computed from the same bf16-rounded operands: the MXU
    # multiplies bf16 exactly and accumulates in f32, so only accumulation
    # order differs.
    params_bf16 = prepare_image_proj_params(
        proj_w, proj_b, ln_w, ln_b,
        clip_extra_context_tokens=clip_extra_context_tokens,
        cross_attention_dim=cross_attention_dim,
        weight_dtype=jnp.bfloat16,
    )
    out_bf16 = image_proj_model(
        image_embeds, params_bf16,
        clip_extra_context_tokens=clip_extra_context_tokens,
        cross_attention_dim=cross_attention_dim,
    )
    out_bf16 = jax.block_until_ready(out_bf16)

    ref_bf16 = reference(
        image_embeds.astype(jnp.bfloat16).astype(jnp.float32),
        proj_w.astype(jnp.bfloat16).astype(jnp.float32),
        proj_b, ln_w, ln_b,
        clip_extra_context_tokens, cross_attention_dim)
    assert out_bf16.shape == (B, clip_extra_context_tokens, cross_attention_dim)
    assert jnp.allclose(out_bf16, ref_bf16, atol=2e-3, rtol=2e-3), \
        float(jnp.max(jnp.abs(out_bf16 - ref_bf16)))

    # --- odd batch (padding path) ---------------------------------------------
    out_b3 = image_proj_model(
        image_embeds[:3], params_f32,
        clip_extra_context_tokens=clip_extra_context_tokens,
        cross_attention_dim=cross_attention_dim,
    )
    out_b3 = jax.block_until_ready(out_b3)
    assert out_b3.shape == (3, clip_extra_context_tokens, cross_attention_dim)
    assert jnp.allclose(out_b3, ref[:3], atol=1e-4, rtol=1e-4)

    print("KERNEL_OK")
</pallas_src>

<mosaic_0001>
module attributes {stable_mosaic.version = 11 : i64} {
  func.func @_image_proj_kernel(%arg0: i32, %arg1: memref<8x128xf32, #tpu.memory_space<vmem>>, %arg2: memref<1x128x256xf32, #tpu.memory_space<vmem>>, %arg3: memref<1x256xf32, #tpu.memory_space<vmem>>, %arg4: memref<1x128xf32, #tpu.memory_space<vmem>>, %arg5: memref<1x128xf32, #tpu.memory_space<vmem>>, %arg6: memref<8x256xf32, #tpu.memory_space<vmem>>) attributes {dimension_semantics = [#tpu.dimension_semantics<parallel>], iteration_bounds = array<i64: 2>, scalar_prefetch = 0 : i64, scratch_operands = 0 : i64, tpu.core_type = #tpu.core_type<tc>, window_params = [{pipeline_mode = #tpu.pipeline_mode<synchronous>, transform_indices = @transform_0, window_bounds = array<i64: 8, 128>}, {transform_indices = @transform_1, window_bounds = array<i64: 1, 128, 256>}, {transform_indices = @transform_2, window_bounds = array<i64: 1, 256>}, {pipeline_mode = #tpu.pipeline_mode<synchronous>, transform_indices = @transform_3, window_bounds = array<i64: 1, 128>}, {pipeline_mode = #tpu.pipeline_mode<synchronous>, transform_indices = @transform_4, window_bounds = array<i64: 1, 128>}, {transform_indices = @transform_5, window_bounds = array<i64: 8, 256>}]} {
    %c0 = arith.constant 0 : index
    %c0_0 = arith.constant 0 : index
    %0 = vector.load %arg1[%c0, %c0_0] : memref<8x128xf32, #tpu.memory_space<vmem>>, vector<8x128xf32>
    %c0_1 = arith.constant 0 : index
    %c0_2 = arith.constant 0 : index
    %c0_3 = arith.constant 0 : index
    %1 = vector.load %arg2[%c0_1, %c0_2, %c0_3] : memref<1x128x256xf32, #tpu.memory_space<vmem>>, vector<1x128x256xf32>
    %2 = vector.shape_cast %1 : vector<1x128x256xf32> to vector<128x256xf32>
    %cst = arith.constant dense<0.000000e+00> : vector<8x256xf32>
    %3 = tpu.matmul %0, %2, %cst {dimension_numbers = #tpu.dot_dimension_numbers<[1], [0], [0], [1], [0, 0, 1, 1], [], []>} : vector<8x128xf32>, vector<128x256xf32>, vector<8x256xf32> -> vector<8x256xf32>
    %c0_4 = arith.constant 0 : index
    %c0_5 = arith.constant 0 : index
    %4 = vector.load %arg3[%c0_4, %c0_5] : memref<1x256xf32, #tpu.memory_space<vmem>>, vector<1x256xf32>
    %5 = vector.broadcast %4 : vector<1x256xf32> to vector<8x256xf32>
    %6 = arith.addf %3, %5 : vector<8x256xf32>
    %c0_6 = arith.constant 0 : index
    %c0_7 = arith.constant 0 : index
    %7 = vector.load %arg4[%c0_6, %c0_7] : memref<1x128xf32, #tpu.memory_space<vmem>>, vector<1x128xf32>
    %c0_8 = arith.constant 0 : index
    %c0_9 = arith.constant 0 : index
    %8 = vector.load %arg5[%c0_8, %c0_9] : memref<1x128xf32, #tpu.memory_space<vmem>>, vector<1x128xf32>
    %9 = vector.extract_strided_slice %6 {offsets = [0, 0], sizes = [8, 128], strides = [1, 1]} : vector<8x256xf32> to vector<8x128xf32>
    %cst_10 = arith.constant dense<0.000000e+00> : vector<8xf32>
    %10 = vector.multi_reduction <add>, %9, %cst_10 [1] : vector<8x128xf32> to vector<8xf32>
    %11 = vector.shape_cast %10 : vector<8xf32> to vector<8x1xf32>
    %cst_11 = arith.constant 1.280000e+02 : f32
    %12 = vector.broadcast %cst_11 : f32 to vector<8x1xf32>
    %13 = arith.divf %11, %12 : vector<8x1xf32>
    %14 = vector.broadcast %13 : vector<8x1xf32> to vector<8x128xf32>
    %15 = arith.subf %9, %14 : vector<8x128xf32>
    %16 = arith.mulf %15, %15 : vector<8x128xf32>
    %cst_12 = arith.constant dense<0.000000e+00> : vector<8xf32>
    %17 = vector.multi_reduction <add>, %16, %cst_12 [1] : vector<8x128xf32> to vector<8xf32>
    %18 = vector.shape_cast %17 : vector<8xf32> to vector<8x1xf32>
    %cst_13 = arith.constant 1.280000e+02 : f32
    %19 = vector.broadcast %cst_13 : f32 to vector<8x1xf32>
    %20 = arith.divf %18, %19 : vector<8x1xf32>
    %cst_14 = arith.constant 9.99999974E-6 : f32
    %21 = vector.broadcast %cst_14 : f32 to vector<8x1xf32>
    %22 = arith.addf %20, %21 : vector<8x1xf32>
    %23 = math.rsqrt %22 : vector<8x1xf32>
    %24 = vector.broadcast %23 : vector<8x1xf32> to vector<8x128xf32>
    %25 = arith.mulf %15, %24 : vector<8x128xf32>
    %26 = vector.broadcast %7 : vector<1x128xf32> to vector<8x128xf32>
    %27 = arith.mulf %25, %26 : vector<8x128xf32>
    %28 = vector.broadcast %8 : vector<1x128xf32> to vector<8x128xf32>
    %29 = arith.addf %27, %28 : vector<8x128xf32>
    %c0_15 = arith.constant 0 : index
    %c0_16 = arith.constant 0 : index
    %30 = vector.load %arg6[%c0_15, %c0_16] : memref<8x256xf32, #tpu.memory_space<vmem>>, vector<8x128xf32>
    tpu.vector_store %arg6[%c0_15, %c0_16], %29 {strides = array<i32>} : memref<8x256xf32, #tpu.memory_space<vmem>>, vector<8x128xf32>,
    %31 = vector.extract_strided_slice %6 {offsets = [0, 128], sizes = [8, 128], strides = [1, 1]} : vector<8x256xf32> to vector<8x128xf32>
    %cst_17 = arith.constant dense<0.000000e+00> : vector<8xf32>
    %32 = vector.multi_reduction <add>, %31, %cst_17 [1] : vector<8x128xf32> to vector<8xf32>
    %33 = vector.shape_cast %32 : vector<8xf32> to vector<8x1xf32>
    %cst_18 = arith.constant 1.280000e+02 : f32
    %34 = vector.broadcast %cst_18 : f32 to vector<8x1xf32>
    %35 = arith.divf %33, %34 : vector<8x1xf32>
    %36 = vector.broadcast %35 : vector<8x1xf32> to vector<8x128xf32>
    %37 = arith.subf %31, %36 : vector<8x128xf32>
    %38 = arith.mulf %37, %37 : vector<8x128xf32>
    %cst_19 = arith.constant dense<0.000000e+00> : vector<8xf32>
    %39 = vector.multi_reduction <add>, %38, %cst_19 [1] : vector<8x128xf32> to vector<8xf32>
    %40 = vector.shape_cast %39 : vector<8xf32> to vector<8x1xf32>
    %cst_20 = arith.constant 1.280000e+02 : f32
    %41 = vector.broadcast %cst_20 : f32 to vector<8x1xf32>
    %42 = arith.divf %40, %41 : vector<8x1xf32>
    %cst_21 = arith.constant 9.99999974E-6 : f32
    %43 = vector.broadcast %cst_21 : f32 to vector<8x1xf32>
    %44 = arith.addf %42, %43 : vector<8x1xf32>
    %45 = math.rsqrt %44 : vector<8x1xf32>
    %46 = vector.broadcast %45 : vector<8x1xf32> to vector<8x128xf32>
    %47 = arith.mulf %37, %46 : vector<8x128xf32>
    %48 = vector.broadcast %7 : vector<1x128xf32> to vector<8x128xf32>
    %49 = arith.mulf %47, %48 : vector<8x128xf32>
    %50 = vector.broadcast %8 : vector<1x128xf32> to vector<8x128xf32>
    %51 = arith.addf %49, %50 : vector<8x128xf32>
    %c0_22 = arith.constant 0 : index
    %c128 = arith.constant 128 : index
    %52 = vector.load %arg6[%c0_22, %c128] : memref<8x256xf32, #tpu.memory_space<vmem>>, vector<8x128xf32>
    tpu.vector_store %arg6[%c0_22, %c128], %51 {strides = array<i32>} : memref<8x256xf32, #tpu.memory_space<vmem>>, vector<8x128xf32>,
    return
  }
  func.func @transform_0(%arg0: i32) -> (i32, i32) {
    %c0_i32 = arith.constant 0 : i32
    %c0_i32_0 = arith.constant 0 : i32
    %c0_i32_1 = arith.constant 0 : i32
    return %c0_i32, %c0_i32_0 : i32, i32
  }
  func.func @transform_1(%arg0: i32) -> (i32, i32, i32) {
    %c0_i32 = arith.constant 0 : i32
    %c0_i32_0 = arith.constant 0 : i32
    %c0_i32_1 = arith.constant 0 : i32
    return %arg0, %c0_i32, %c0_i32_0 : i32, i32, i32
  }
  func.func @transform_2(%arg0: i32) -> (i32, i32) {
    %c0_i32 = arith.constant 0 : i32
    %c0_i32_0 = arith.constant 0 : i32
    return %c0_i32, %arg0 : i32, i32
  }
  func.func @transform_3(%arg0: i32) -> (i32, i32) {
    %c0_i32 = arith.constant 0 : i32
    %c0_i32_0 = arith.constant 0 : i32
    %c0_i32_1 = arith.constant 0 : i32
    return %c0_i32, %c0_i32_0 : i32, i32
  }
  func.func @transform_4(%arg0: i32) -> (i32, i32) {
    %c0_i32 = arith.constant 0 : i32
    %c0_i32_0 = arith.constant 0 : i32
    %c0_i32_1 = arith.constant 0 : i32
    return %c0_i32, %c0_i32_0 : i32, i32
  }
  func.func @transform_5(%arg0: i32) -> (i32, i32) {
    %c0_i32 = arith.constant 0 : i32
    %c0_i32_0 = arith.constant 0 : i32
    return %c0_i32, %arg0 : i32, i32
  }
}

</mosaic_0001>

<llo_original>
// kernel: tpu_custom_call.1
$region0: #{tpu_custom_call.1}
  #allocation0 [shape = 'u32[]', space=smem, size = 0x4, offset = 0x4, fixed_abs, tag = 'smem constant byte address 0x4 - core index']
  #allocation1 [shape = 'u32[144,128]{1,0:T(1,128)}', space=vmem, size = 0x12000, scoped, tag = 'internal scratch']
  %s0 = inlined_call_operand.hbm [shape: f32[8,128], index: 0, kind: input, shape index: {}]
  %s1 = inlined_call_operand.hbm [shape: f32[2,128,256], index: 1, kind: input, shape index: {}]
  %s2 = inlined_call_operand.hbm [shape: f32[1,512], index: 2, kind: input, shape index: {}]
  %s3 = inlined_call_operand.vmem [shape: f32[1,128], index: 3, kind: input, shape index: {}]
  %s4 = inlined_call_operand.vmem [shape: f32[1,128], index: 4, kind: input, shape index: {}]
  %s5 = inlined_call_operand.hbm [shape: f32[8,512], index: 5, kind: output, shape index: {}]
  %s6 = sld [smem:[#allocation0]]
  $region65: #{tpu_custom_call.1} parent=0
    _
  %s8 = ssub.s32 1, %s6
  %s9 = scalar_select 0, %s8, %s6
  $region1: #{tpu_custom_call.1} parent=0
    #allocation2 [shape = 'u8[4096]{0}', space=vmem, size = 0x1000, scoped, tag = 'input window, operand 0, single buffered']
    #allocation3 [shape = 's32[2]{0}', space=sflag, size = 0x8, scoped, tag = 'scoped memory for tpu_custom_call.1']
    #allocation4 [shape = 's32[2]{0}', space=sflag, size = 0x8, scoped, tag = 'scoped memory for tpu_custom_call.1']
    #allocation5 [shape = 'u8[262144]{0}', space=vmem, size = 0x40000, scoped, tag = 'input window, operand 1']
    #allocation6 [shape = 's32[2]{0}', space=sflag, size = 0x8, scoped, tag = 'scoped memory for tpu_custom_call.1']
    #allocation7 [shape = 'u8[2048]{0}', space=vmem, size = 0x800, scoped, tag = 'input window, operand 2']
    #allocation8 [shape = 'u8[16384]{0}', space=vmem, size = 0x4000, scoped, tag = 'output window, operand 0']
    %10 = vsyncpa [#allocation3], 0
    %11 = vsyncpa [#allocation6], 0
    %s12 = scalar_lea.sflag [#allocation6], 1
    %13 = vsyncpa %s12, 0
    %14 = vsyncpa [#allocation4], 0
    %s15 = scalar_lea.sflag [#allocation4], 1
    %16 = vsyncpa %s15, 0
    loop: start=0, step=1, limit=4
    $region2: #{tpu_custom_call.1} parent=1 // loop_pre_header
      _
    $region3: #{tpu_custom_call.1} parent=1 // loop_header
      %s18 = sphi 0, %s22
      %p19 = scmp.ge.s32.totalorder %s18, 4
      %s26 = sphi 0, %s26
      %s28 = sphi 0, %s26
      %s29 = sphi 0, %s28
      %s43 = sphi 0, %s29
      %s49 = sphi 0, %s51
      %s52 = sphi 0, %s49
      %s53 = sphi 0, %s52
      %s69 = sphi 0, %s53
      %s75 = sphi 0, %s77
      %s78 = sphi 0, %s75
      %s79 = sphi 0, %s78
      %s95 = sphi 0, %s79
      %s99 = sphi 0, %s99
      %s101 = sphi 0, %s99
      %s102 = sphi 0, %s101
      %s116 = sphi 0, %s102
      %s120 = sphi 0, %s120
      %s122 = sphi 0, %s120
      %s123 = sphi 0, %s122
      %s137 = sphi 0, %s123
      %s143 = sphi 0, %s145
      %s146 = sphi 0, %s143
      %s147 = sphi 0, %s146
      %s163 = sphi 0, %s147
    $region4: #{tpu_custom_call.1} parent=1 // loop_header_branch
      %21 = sbr.rel (%p19) target = $region8
    $region5: #{tpu_custom_call.1} parent=1 // loop_body
      %s23 = ssub.s32 %s18, 1
      %s24 = ssub.s32 %s18, 2
      %s25 = sadd.s32 %s18, 1
      %s27 = sadd.s32 %s26, 1
      %p30 = scmp.eq.s32.totalorder %s18, 1
      %p31 = scmp.ne.s32.totalorder %s26, %s28
      %p32 = scmp.eq.s32.totalorder %s18, 0
      %p33 = por %p31, %p32
      %p34 = scmp.ne.s32.totalorder %s26, %s28
      %p35 = scmp.eq.s32.totalorder %s23, 1
      %p36 = por %p34, %p35
      %p37 = scmp.ne.s32.totalorder %s28, %s29
      %p38 = scmp.eq.s32.totalorder %s23, 0
      %p39 = por %p37, %p38
      %p40 = scmp.ne.s32.totalorder %s28, %s29
      %p41 = scmp.eq.s32.totalorder %s24, 1
      %p42 = por %p40, %p41
      %p44 = scmp.ne.s32.totalorder %s29, %s43
      %p45 = scmp.eq.s32.totalorder %s24, 0
      %p46 = por %p44, %p45
      %s47 = ssub.s32 %s18, %s25
      %p48 = scmp.eq.s32.totalorder %s47, 0
      %s50 = sadd.s32 %s49, 1
      %s51 = scalar_select %p48, %s49, %s50
      %p54 = pneg %p48
      %p55 = scmp.eq.s32.totalorder %s18, 1
      %p56 = por %p54, %p55
      %p57 = scmp.ne.s32.totalorder %s49, %s52
      %p58 = scmp.eq.s32.totalorder %s18, 0
      %p59 = por %p57, %p58
      %p60 = scmp.ne.s32.totalorder %s49, %s52
      %p61 = scmp.eq.s32.totalorder %s23, 1
      %p62 = por %p60, %p61
      %p63 = scmp.ne.s32.totalorder %s52, %s53
      %p64 = scmp.eq.s32.totalorder %s23, 0
      %p65 = por %p63, %p64
      %p66 = scmp.ne.s32.totalorder %s52, %s53
      %p67 = scmp.eq.s32.totalorder %s24, 1
      %p68 = por %p66, %p67
      %p70 = scmp.ne.s32.totalorder %s53, %s69
      %p71 = scmp.eq.s32.totalorder %s24, 0
      %p72 = por %p70, %p71
      %s73 = ssub.s32 %s18, %s25
      %p74 = scmp.eq.s32.totalorder %s73, 0
      %s76 = sadd.s32 %s75, 1
      %s77 = scalar_select %p74, %s75, %s76
      %p80 = pneg %p74
      %p81 = scmp.eq.s32.totalorder %s18, 1
      %p82 = por %p80, %p81
      %p83 = scmp.ne.s32.totalorder %s75, %s78
      %p84 = scmp.eq.s32.totalorder %s18, 0
      %p85 = por %p83, %p84
      %p86 = scmp.ne.s32.totalorder %s75, %s78
      %p87 = scmp.eq.s32.totalorder %s23, 1
      %p88 = por %p86, %p87
      %p89 = scmp.ne.s32.totalorder %s78, %s79
      %p90 = scmp.eq.s32.totalorder %s23, 0
      %p91 = por %p89, %p90
      %p92 = scmp.ne.s32.totalorder %s78, %s79
      %p93 = scmp.eq.s32.totalorder %s24, 1
      %p94 = por %p92, %p93
      %p96 = scmp.ne.s32.totalorder %s79, %s95
      %p97 = scmp.eq.s32.totalorder %s24, 0
      %p98 = por %p96, %p97
      %s100 = sadd.s32 %s99, 1
      %p103 = scmp.eq.s32.totalorder %s18, 1
      %p104 = scmp.ne.s32.totalorder %s99, %s101
      %p105 = scmp.eq.s32.totalorder %s18, 0
      %p106 = por %p104, %p105
      %p107 = scmp.ne.s32.totalorder %s99, %s101
      %p108 = scmp.eq.s32.totalorder %s23, 1
      %p109 = por %p107, %p108
      %p110 = scmp.ne.s32.totalorder %s101, %s102
      %p111 = scmp.eq.s32.totalorder %s23, 0
      %p112 = por %p110, %p111
      %p113 = scmp.ne.s32.totalorder %s101, %s102
      %p114 = scmp.eq.s32.totalorder %s24, 1
      %p115 = por %p113, %p114
      %p117 = scmp.ne.s32.totalorder %s102, %s116
      %p118 = scmp.eq.s32.totalorder %s24, 0
      %p119 = por %p117, %p118
      %s121 = sadd.s32 %s120, 1
      %p124 = scmp.eq.s32.totalorder %s18, 1
      %p125 = scmp.ne.s32.totalorder %s120, %s122
      %p126 = scmp.eq.s32.totalorder %s18, 0
      %p127 = por %p125, %p126
      %p128 = scmp.ne.s32.totalorder %s120, %s122
      %p129 = scmp.eq.s32.totalorder %s23, 1
      %p130 = por %p128, %p129
      %p131 = scmp.ne.s32.totalorder %s122, %s123
      %p132 = scmp.eq.s32.totalorder %s23, 0
      %p133 = por %p131, %p132
      %p134 = scmp.ne.s32.totalorder %s122, %s123
      %p135 = scmp.eq.s32.totalorder %s24, 1
      %p136 = por %p134, %p135
      %p138 = scmp.ne.s32.totalorder %s123, %s137
      %p139 = scmp.eq.s32.totalorder %s24, 0
      %p140 = por %p138, %p139
      %s141 = ssub.s32 %s18, %s25
      %p142 = scmp.eq.s32.totalorder %s141, 0
      %s144 = sadd.s32 %s143, 1
      %s145 = scalar_select %p142, %s143, %s144
      %p148 = pneg %p142
      %p149 = scmp.eq.s32.totalorder %s18, 1
      %p150 = por %p148, %p149
      %p151 = scmp.ne.s32.totalorder %s143, %s146
      %p152 = scmp.eq.s32.totalorder %s18, 0
      %p153 = por %p151, %p152
      %p154 = scmp.ne.s32.totalorder %s143, %s146
      %p155 = scmp.eq.s32.totalorder %s23, 1
      %p156 = por %p154, %p155
      %p157 = scmp.ne.s32.totalorder %s146, %s147
      %p158 = scmp.eq.s32.totalorder %s23, 0
      %p159 = por %p157, %p158
      %p160 = scmp.ne.s32.totalorder %s146, %s147
      %p161 = scmp.eq.s32.totalorder %s24, 1
      %p162 = por %p160, %p161
      %p164 = scmp.ne.s32.totalorder %s147, %s163
      %p165 = scmp.eq.s32.totalorder %s24, 0
      %p166 = por %p164, %p165
      %p167 = scmp.le.s32.totalorder 1, %s18
      %p168 = scmp.lt.s32.totalorder %s18, 3
      %p169 = pnand %p167, %p168
      %p170 = pneg %p169
      // Predicated region
      $region9: #{tpu_custom_call.1} parent=5 // pred_check
        _
      $region10: #{tpu_custom_call.1} parent=5 // pred_check_branch
        %172 = sbr.rel (%p169) target = $region12
      $region11: #{tpu_custom_call.1} parent=5 // pred_region
        %s173 = ssub.s32 %s18, 1
        // Predicated region
        $region13: #{tpu_custom_call.1} parent=11 // pred_check
          %p174 = pneg %p39
        $region14: #{tpu_custom_call.1} parent=11 // pred_check_branch
          %176 = sbr.rel (%p174) target = $region16
        $region15: #{tpu_custom_call.1} parent=11 // pred_region
          %s178 = ssub.s32 128, 128
          %179 = vsyncadd [#allocation3], %s178
          %s181 = sshll.u32 [#allocation2], 4
          %s182 = int_to_ptr.vmem [resolvable:$true] %s181
          %184 = dma.hbm_to_vmem [thread:$0]  %s0, 128, %s182, [#allocation3]
        $region16: #{tpu_custom_call.1} parent=11 // pred_fallthru
          _
        // Predicated region
        $region17: #{tpu_custom_call.1} parent=11 // pred_check
          %p185 = pneg %p112
        $region18: #{tpu_custom_call.1} parent=11 // pred_check_branch
          %187 = sbr.rel (%p185) target = $region20
        $region19: #{tpu_custom_call.1} parent=11 // pred_region
          _
        $region20: #{tpu_custom_call.1} parent=11 // pred_fallthru
          _
        // Predicated region
        $region21: #{tpu_custom_call.1} parent=11 // pred_check
          %p188 = pneg %p133
        $region22: #{tpu_custom_call.1} parent=11 // pred_check_branch
          %190 = sbr.rel (%p188) target = $region24
        $region23: #{tpu_custom_call.1} parent=11 // pred_region
          _
        $region24: #{tpu_custom_call.1} parent=11 // pred_fallthru
          _
      $region12: #{tpu_custom_call.1} parent=5 // pred_fallthru
        _
      %p191 = scmp.lt.s32.totalorder %s18, 2
      // Predicated region
      $region25: #{tpu_custom_call.1} parent=5 // pred_check
        %p192 = pneg %p191
      $region26: #{tpu_custom_call.1} parent=5 // pred_check_branch
        %194 = sbr.rel (%p192) target = $region28
      $region27: #{tpu_custom_call.1} parent=5 // pred_region
        // Predicated region
        $region29: #{tpu_custom_call.1} parent=27 // pred_check
          %p195 = pneg %p59
        $region30: #{tpu_custom_call.1} parent=27 // pred_check_branch
          %197 = sbr.rel (%p195) target = $region32
        $region31: #{tpu_custom_call.1} parent=27 // pred_region
          %s198 = sand.u32 %s18, 1
          %s199 = scalar_lea.sflag [#allocation6], %s198
          %s200 = sand.u32 %s49, 1
          %s201 = smul.addr %s200, 256
          %s202 = scalar_lea.vmem [#allocation5], %s201
          %s204 = ssub.s32 4096, 4096
          %205 = vsyncadd %s199, %s204
          %s206 = smul.addr %s18, 32
          %s207 = smul.addr %s206, 128
          %s208 = scalar_lea.hbm %s1, %s207
          %s209 = sshll.u32 %s202, 4
          %s210 = int_to_ptr.vmem [resolvable:$true] %s209
          %215 = dma.hbm_to_vmem [thread:$0]  %s208, 4096, %s210, %s199, 256, 256, 16
        $region32: #{tpu_custom_call.1} parent=27 // pred_fallthru
          _
        // Predicated region
        $region33: #{tpu_custom_call.1} parent=27 // pred_check
          %p216 = pneg %p85
        $region34: #{tpu_custom_call.1} parent=27 // pred_check_branch
          %218 = sbr.rel (%p216) target = $region36
        $region35: #{tpu_custom_call.1} parent=27 // pred_region
          %s219 = sand.u32 %s18, 1
          %s220 = scalar_lea.sflag [#allocation6], %s219
          %s221 = sand.u32 %s75, 1
          %s222 = smul.addr %s221, 2
          %s223 = scalar_lea.vmem [#allocation7], %s222
          %s224 = smul.u32 2, %s18
          %s226 = ssub.s32 32, 32
          %227 = vsyncadd %s220, %s226
          %s228 = smul.addr %s224, 16
          %s229 = scalar_lea.hbm %s2, %s228
          %s231 = sshll.u32 %s223, 4
          %s232 = int_to_ptr.vmem [resolvable:$true] %s231
          %234 = dma.hbm_to_vmem [thread:$0]  %s229, 32, %s232, %s220
        $region36: #{tpu_custom_call.1} parent=27 // pred_fallthru
          _
      $region28: #{tpu_custom_call.1} parent=5 // pred_fallthru
        _
      %p235 = scmp.le.s32.totalorder 1, %s18
      %p236 = scmp.lt.s32.totalorder %s18, 3
      %p237 = pnand %p235, %p236
      %p238 = pneg %p237
      // Predicated region
      $region37: #{tpu_custom_call.1} parent=5 // pred_check
        _
      $region38: #{tpu_custom_call.1} parent=5 // pred_check_branch
        %240 = sbr.rel (%p237) target = $region40
      $region39: #{tpu_custom_call.1} parent=5 // pred_region
        %s241 = ssub.s32 %s18, 1
        // Predicated region
        $region41: #{tpu_custom_call.1} parent=39 // pred_check
          %p242 = pneg %p39
        $region42: #{tpu_custom_call.1} parent=39 // pred_check_branch
          %244 = sbr.rel (%p242) target = $region44
        $region43: #{tpu_custom_call.1} parent=39 // pred_region
          %245 = dma.done [#allocation3], 128
        $region44: #{tpu_custom_call.1} parent=39 // pred_fallthru
          _
        %s246 = sand.u32 %s23, 1
        %s247 = scalar_lea.sflag [#allocation6], %s246
        %s248 = sand.u32 %s52, 1
        %s249 = smul.addr %s248, 256
        %s250 = scalar_lea.vmem [#allocation5], %s249
        // Predicated region
        $region45: #{tpu_custom_call.1} parent=39 // pred_check
          %p251 = pneg %p65
        $region46: #{tpu_custom_call.1} parent=39 // pred_check_branch
          %253 = sbr.rel (%p251) target = $region48
        $region47: #{tpu_custom_call.1} parent=39 // pred_region
          %254 = dma.done %s247, 4096
        $region48: #{tpu_custom_call.1} parent=39 // pred_fallthru
          _
        %s255 = sand.u32 %s23, 1
        %s256 = scalar_lea.sflag [#allocation6], %s255
        %s257 = sand.u32 %s78, 1
        %s258 = smul.addr %s257, 2
        %s259 = scalar_lea.vmem [#allocation7], %s258
        // Predicated region
        $region49: #{tpu_custom_call.1} parent=39 // pred_check
          %p260 = pneg %p91
        $region50: #{tpu_custom_call.1} parent=39 // pred_check_branch
          %262 = sbr.rel (%p260) target = $region52
        $region51: #{tpu_custom_call.1} parent=39 // pred_region
          %263 = dma.done %s256, 32
        $region52: #{tpu_custom_call.1} parent=39 // pred_fallthru
          _
        %p264 = pneg %p39
        %p265 = pneg %p36
        %s266 = sand.u32 %s23, 1
        %s267 = scalar_lea.sflag [#allocation6], %s266
        %s268 = sand.u32 %s52, 1
        %s269 = smul.addr %s268, 256
        %s270 = scalar_lea.vmem [#allocation5], %s269
        %p271 = pneg %p65
        %p272 = pneg %p62
        %s273 = sand.u32 %s23, 1
        %s274 = scalar_lea.sflag [#allocation6], %s273
        %s275 = sand.u32 %s78, 1
        %s276 = smul.addr %s275, 2
        %s277 = scalar_lea.vmem [#allocation7], %s276
        %p278 = pneg %p91
        %p279 = pneg %p88
        %p280 = pneg %p112
        %p281 = pneg %p109
        %p282 = pneg %p133
        %p283 = pneg %p130
        %p284 = pneg %p159
        %p285 = pneg %p156
        %s286 = sand.u32 %s146, 1
        %s287 = scalar_lea.sflag [#allocation4], %s286
        %s288 = sand.u32 %s146, 1
        %s289 = smul.addr %s288, 16
        %s290 = scalar_lea.vmem [#allocation8], %s289
        %s291 = smul.u32 2, %s23
        %s292 = smul.u32 2, %s23
        %v293 = vld [vmem:[#allocation2] sm:$0xff]
        %v294 = vld [vmem:[%s250] sm:$0xff]
        %v295 = vld [vmem:[%s250 + $0x8] sm:$0xff]
        %v296 = vld [vmem:[%s250 + $0x10] sm:$0xff]
        %v297 = vld [vmem:[%s250 + $0x18] sm:$0xff]
        %v298 = vld [vmem:[%s250 + $0x20] sm:$0xff]
        %v299 = vld [vmem:[%s250 + $0x28] sm:$0xff]
        %v300 = vld [vmem:[%s250 + $0x30] sm:$0xff]
        %v301 = vld [vmem:[%s250 + $0x38] sm:$0xff]
        %v302 = vld [vmem:[%s250 + $0x40] sm:$0xff]
        %v303 = vld [vmem:[%s250 + $0x48] sm:$0xff]
        %v304 = vld [vmem:[%s250 + $0x50] sm:$0xff]
        %v305 = vld [vmem:[%s250 + $0x58] sm:$0xff]
        %v306 = vld [vmem:[%s250 + $0x60] sm:$0xff]
        %v307 = vld [vmem:[%s250 + $0x68] sm:$0xff]
        %v308 = vld [vmem:[%s250 + $0x70] sm:$0xff]
        %v309 = vld [vmem:[%s250 + $0x78] sm:$0xff]
        %v310 = vld [vmem:[%s250 + $0x80] sm:$0xff]
        %v311 = vld [vmem:[%s250 + $0x88] sm:$0xff]
        %v312 = vld [vmem:[%s250 + $0x90] sm:$0xff]
        %v313 = vld [vmem:[%s250 + $0x98] sm:$0xff]
        %v314 = vld [vmem:[%s250 + $0xa0] sm:$0xff]
        %v315 = vld [vmem:[%s250 + $0xa8] sm:$0xff]
        %v316 = vld [vmem:[%s250 + $0xb0] sm:$0xff]
        %v317 = vld [vmem:[%s250 + $0xb8] sm:$0xff]
        %v318 = vld [vmem:[%s250 + $0xc0] sm:$0xff]
        %v319 = vld [vmem:[%s250 + $0xc8] sm:$0xff]
        %v320 = vld [vmem:[%s250 + $0xd0] sm:$0xff]
        %v321 = vld [vmem:[%s250 + $0xd8] sm:$0xff]
        %v322 = vld [vmem:[%s250 + $0xe0] sm:$0xff]
        %v323 = vld [vmem:[%s250 + $0xe8] sm:$0xff]
        %v324 = vld [vmem:[%s250 + $0xf0] sm:$0xff]
        %v325 = vld [vmem:[%s250 + $0xf8] sm:$0xff]
        %v326 = vld [vmem:[%s259] sm:$0x3]
        %v328 = vlaneseq
        %v329 = vshrl.u32 %v328, 7
        %v330 = vsub.s32 0, %v329
        %v331 = vrot.slane %v326, %v330
        %v332 = vlaneseq
        %v333 = vshrl.u32 %v332, 7
        %v334 = vsub.s32 1, %v333
        %v335 = vrot.slane %v326, %v334
        %338 = vmatprep.subr.mxu0 %v325
        %339 = vmatpush1.msra.mxu0 %v324
        %340 = vmatprep.subr.mxu0 %v323
        %341 = vmatpush1.msra.mxu0 %v322
        %342 = vmatprep.subr.mxu0 %v321
        %343 = vmatpush1.msra.mxu0 %v320
        %344 = vmatprep.subr.mxu0 %v319
        %345 = vmatpush1.msra.mxu0 %v318
        %346 = vmatprep.subr.mxu0 %v317
        %347 = vmatpush1.msra.mxu0 %v316
        %348 = vmatprep.subr.mxu0 %v315
        %349 = vmatpush1.msra.mxu0 %v314
        %350 = vmatprep.subr.mxu0 %v313
        %351 = vmatpush1.msra.mxu0 %v312
        %352 = vmatprep.subr.mxu0 %v311
        %353 = vmatpush1.msra.mxu0 %v310
        %354 = vmatprep.subr.mxu0 %v309
        %355 = vmatpush1.msra.mxu0 %v308
        %356 = vmatprep.subr.mxu0 %v307
        %357 = vmatpush1.msra.mxu0 %v306
        %358 = vmatprep.subr.mxu0 %v305
        %359 = vmatpush1.msra.mxu0 %v304
        %360 = vmatprep.subr.mxu0 %v303
        %361 = vmatpush1.msra.mxu0 %v302
        %362 = vmatprep.subr.mxu0 %v301
        %363 = vmatpush1.msra.mxu0 %v300
        %364 = vmatprep.subr.mxu0 %v299
        %365 = vmatpush1.msra.mxu0 %v298
        %366 = vmatprep.subr.mxu0 %v297
        %367 = vmatpush1.msra.mxu0 %v296
        %368 = vmatprep.subr.mxu0 %v295
        %369 = vmatpush1.msra.mxu0 %v294
        %370 = vmatprep.subr.mxu0 0.0
        %371 = vmatpush2.msra.mxu0 0.0
        %372 = vmatprep.subr.mxu0 0.0
        %373 = vmatpush2.msra.mxu0 0.0
        %374 = vmatprep.subr.mxu0 0.0
        %375 = vmatpush2.msra.mxu0 0.0
        %376 = vmatprep.subr.mxu0 0.0
        %377 = vmatpush2.msra.mxu0 0.0
        %378 = vmatprep.subr.mxu0 0.0
        %379 = vmatpush2.msra.mxu0 0.0
        %380 = vmatprep.subr.mxu0 0.0
        %381 = vmatpush2.msra.mxu0 0.0
        %382 = vmatprep.subr.mxu0 0.0
        %383 = vmatpush2.msra.mxu0 0.0
        %384 = vmatprep.subr.mxu0 0.0
        %385 = vmatpush2.msra.mxu0 0.0
        %386 = vmatprep.subr.mxu0 0.0
        %387 = vmatpush2.msra.mxu0 0.0
        %388 = vmatprep.subr.mxu0 0.0
        %389 = vmatpush2.msra.mxu0 0.0
        %390 = vmatprep.subr.mxu0 0.0
        %391 = vmatpush2.msra.mxu0 0.0
        %392 = vmatprep.subr.mxu0 0.0
        %393 = vmatpush2.msra.mxu0 0.0
        %394 = vmatprep.subr.mxu0 0.0
        %395 = vmatpush2.msra.mxu0 0.0
        %396 = vmatprep.subr.mxu0 0.0
        %397 = vmatpush2.msra.mxu0 0.0
        %398 = vmatprep.subr.mxu0 0.0
        %399 = vmatpush2.msra.mxu0 0.0
        %400 = vmatprep.subr.mxu0 0.0
        %401 = vmatpush2.msra.mxu0 0.0
        %402 = vmatprep.mubr.f32.mxu0 0.0
        %403 = vmatmul.mubr.f32.gmra.mxu0 %v293
        %v404 = vpop.f32.mrf.mxu0
        %v405 = vadd.f32 %v331, %v404
        %v406 = vpop.f32.mrf.mxu0
        %v407 = vadd.f32 %v335, %v406
        %408 = vdwg.mxu0
        %v409 = vld [vmem:[%s3] sm:$0x1]
        %v410 = vld [vmem:[%s4] sm:$0x1]
        %411 = vadd.xlane.f32.xlu0 %v405
        %v412 = vpop.xlane.xlu0 %411
        %v413 = vrcp.pop 128.0
        %v414 = vmul.f32 %v412, %v413
        %v415 = vsub.f32 %v405, %v414
        %v416 = vmul.f32 %v415, %v415
        %417 = vadd.xlane.f32.xlu0 %v416
        %v418 = vpop.xlane.xlu0 %417
        %v419 = vmul.f32 %v418, %v413
        %v420 = vadd.f32 %v419, 1e-05
        %v421 = vrsqrt.pop %v420
        %v422 = vmul.f32 %v415, %v421
        %v424 = vlaneseq
        %v425 = vshrl.u32 %v424, 7
        %v426 = vsub.s32 0, %v425
        %v427 = vrot.slane %v409, %v426
        %v429 = vmul.f32 %v422, %v427
        %v431 = vlaneseq
        %v432 = vshrl.u32 %v431, 7
        %v433 = vsub.s32 0, %v432
        %v434 = vrot.slane %v410, %v433
        %v436 = vadd.f32 %v429, %v434
        %437 = vst [vmem:[%s290] sm:$0xff] %v436
        %438 = vadd.xlane.f32.xlu0 %v407
        %v439 = vpop.xlane.xlu0 %438
        %v440 = vmul.f32 %v439, %v413
        %v441 = vsub.f32 %v407, %v440
        %v442 = vmul.f32 %v441, %v441
        %443 = vadd.xlane.f32.xlu0 %v442
        %v444 = vpop.xlane.xlu0 %443
        %v445 = vmul.f32 %v444, %v413
        %v446 = vadd.f32 %v445, 1e-05
        %v447 = vrsqrt.pop %v446
        %v448 = vmul.f32 %v441, %v447
        %v449 = vmul.f32 %v448, %v427
        %v450 = vadd.f32 %v449, %v434
        %451 = vst [vmem:[%s290 + $0x8] sm:$0xff] %v450
        %s452 = sand.u32 %s146, 1
        %s453 = scalar_lea.sflag [#allocation4], %s452
        %s454 = sand.u32 %s146, 1
        %s455 = smul.addr %s454, 16
        %s456 = scalar_lea.vmem [#allocation8], %s455
        // Predicated region
        $region53: #{tpu_custom_call.1} parent=39 // pred_check
          %p457 = pneg %p156
        $region54: #{tpu_custom_call.1} parent=39 // pred_check_branch
          %459 = sbr.rel (%p457) target = $region56
        $region55: #{tpu_custom_call.1} parent=39 // pred_region
          %s460 = smul.u32 2, %s23
          %s462 = ssub.s32 256, 256
          %463 = vsyncadd %s453, %s462
          %s464 = smul.addr %s460, 128
          %s465 = scalar_lea.hbm %s5, %s464
          %s467 = sshll.u32 %s456, 4
          %s468 = int_to_ptr.vmem [resolvable:$true] %s467
          %470 = dma.vmem_to_hbm [thread:$0]  %s468, 256, %s465, %s453
        $region56: #{tpu_custom_call.1} parent=39 // pred_fallthru
          _
      $region40: #{tpu_custom_call.1} parent=5 // pred_fallthru
        _
      %p471 = scmp.le.s32.totalorder 2, %s18
      // Predicated region
      $region57: #{tpu_custom_call.1} parent=5 // pred_check
        %p472 = pneg %p471
      $region58: #{tpu_custom_call.1} parent=5 // pred_check_branch
        %474 = sbr.rel (%p472) target = $region60
      $region59: #{tpu_custom_call.1} parent=5 // pred_region
        %s475 = ssub.s32 %s18, 2
        // Predicated region
        $region61: #{tpu_custom_call.1} parent=59 // pred_check
          %p476 = pneg %p162
        $region62: #{tpu_custom_call.1} parent=59 // pred_check_branch
          %478 = sbr.rel (%p476) target = $region64
        $region63: #{tpu_custom_call.1} parent=59 // pred_region
          %s479 = sand.u32 %s147, 1
          %s480 = scalar_lea.sflag [#allocation4], %s479
          %s481 = sand.u32 %s147, 1
          %s482 = smul.addr %s481, 16
          %s483 = scalar_lea.vmem [#allocation8], %s482
          %484 = dma.done %s480, 256
        $region64: #{tpu_custom_call.1} parent=59 // pred_fallthru
          _
      $region60: #{tpu_custom_call.1} parent=5 // pred_fallthru
        _
    $region6: #{tpu_custom_call.1} parent=1 // loop_footer
      %s22 = sadd.s32 1, %s18
    $region7: #{tpu_custom_call.1} parent=1 // loop_footer_branch
      %17 = sbr.rel target = $region3
    $region8: #{tpu_custom_call.1} parent=1 // loop_exit
      _
    %485 = vsyncpa [#allocation3], 1
    %s486 = scalar_lea.sflag [#allocation3], 1
    %487 = vsyncpa %s486, 1
    %488 = vsyncpa [#allocation6], 1
    %s489 = scalar_lea.sflag [#allocation6], 1
    %490 = vsyncpa %s489, 1
    %491 = vsyncpa [#allocation4], 1
    %s492 = scalar_lea.sflag [#allocation4], 1
    %493 = vsyncpa %s492, 1

</llo_original>
